<compile_context>
chip_gen: v5e
topology: v5e:2x2
jax: 0.10.0
libtpu: 0.0.40
codegen_flags: <defaults>
</compile_context>

<pallas_src>
import functools

import jax
import jax.numpy as jnp
from jax.experimental import pallas as pl
from jax.experimental.pallas import tpu as pltpu

LANE = 128      # f32 lane width
SUBLANE = 8     # f32 sublane tile


def _round_up(v, m):
    return (v + m - 1) // m * m


# ----------------------------------------------------------------------------
# Pallas kernel: (input-norm folded) 3-layer tanh MLP over one batch tile.
# ----------------------------------------------------------------------------
def _gaussian_mlp_kernel(stats_ref, x_ref, params_ref, o_ref, *,
                         offs, d_in_p, d_out_p, tanh_dtype):
    o_w1, o_b1, o_w2, o_b2, o_w3, o_b3 = offs

    # Static, sublane-aligned views into the packed parameter slab (views are free).
    w1 = params_ref[o_w1:o_w1 + d_in_p, :]      # (d_in_p, 128)
    b1 = params_ref[o_b1:o_b1 + 1, :]           # (1, 128)
    w2 = params_ref[o_w2:o_w2 + LANE, :]        # (128, 128)
    b2 = params_ref[o_b2:o_b2 + 1, :]
    w3 = params_ref[o_w3:o_w3 + LANE, :]        # (128, 128)
    b3 = params_ref[o_b3:o_b3 + 1, :]

    # Fold the input batch-normalization into layer 1 (once per grid step; tiny):
    #   ((x - mu) * s) @ W1 + b1 == x @ (W1 * s_col) + (b1 - sum_r (mu*s)_r * W1[r,:])
    st = stats_ref[...]                         # (d_in_p, 2)
    inv_col = st[:, 0:1]                        # 1 / (std + 1e-4)
    mus_col = st[:, 1:2]                        # mu * inv_std
    w1_eff = w1 * inv_col
    b1_eff = b1 - jnp.sum(w1 * mus_col, axis=0, keepdims=True)

    x = x_ref[...]                              # (tm, d_in_p) f32

    # MLP mean network (hidden_size=(32,32), tanh), lane-dense 128-wide path.
    # tanh runs in bf16 (EUP bf16 path on v6e/v7x); matmuls accumulate in f32.
    h1p = jnp.dot(x, w1_eff, preferred_element_type=jnp.float32) + b1_eff
    h1 = jnp.tanh(h1p.astype(tanh_dtype)).astype(jnp.float32)
    h2p = jnp.dot(h1, w2, preferred_element_type=jnp.float32) + b2
    h2 = jnp.tanh(h2p.astype(tanh_dtype)).astype(jnp.float32)
    out = jnp.dot(h2, w3, preferred_element_type=jnp.float32) + b3   # (tm, 128)

    # Narrow lane store: only d_out_p (=8) lanes go back to HBM.
    o_ref[...] = out[:, :d_out_p]


# ----------------------------------------------------------------------------
# Parameter slab: packed ONCE per parameter set, reused across all calls.
# ----------------------------------------------------------------------------
def _pack_param_slab(params):
    w1, b1, w2, b2, w3, b3 = params
    d_in, h1_dim = w1.shape
    h2_dim = w2.shape[1]
    d_out = w3.shape[1]
    assert h1_dim <= LANE and h2_dim <= LANE and d_out <= LANE

    d_in_p = _round_up(d_in, SUBLANE)
    o_w1 = 0
    o_b1 = o_w1 + d_in_p
    o_w2 = o_b1 + SUBLANE
    o_b2 = o_w2 + LANE
    o_w3 = o_b2 + SUBLANE
    o_b3 = o_w3 + LANE
    total_rows = o_b3 + SUBLANE

    slab = jnp.zeros((total_rows, LANE), jnp.float32)
    slab = slab.at[o_w1:o_w1 + d_in, :h1_dim].set(w1.astype(jnp.float32))
    slab = slab.at[o_b1, :h1_dim].set(b1.reshape(-1).astype(jnp.float32))
    slab = slab.at[o_w2:o_w2 + h1_dim, :h2_dim].set(w2.astype(jnp.float32))
    slab = slab.at[o_b2, :h2_dim].set(b2.reshape(-1).astype(jnp.float32))
    slab = slab.at[o_w3:o_w3 + h2_dim, :d_out].set(w3.astype(jnp.float32))
    slab = slab.at[o_b3, :d_out].set(b3.reshape(-1).astype(jnp.float32))

    offs = (o_w1, o_b1, o_w2, o_b2, o_w3, o_b3)
    return jax.device_put(slab), offs, d_in, d_in_p, d_out, total_rows


# ----------------------------------------------------------------------------
# Factory: packs the slab once, returns a jitted forward(x).
# ----------------------------------------------------------------------------
def make_gaussian_mlp_forward(params, *, max_tile_rows=512,
                              hidden_tanh_dtype=jnp.bfloat16):
    slab, offs, d_in, d_in_p, d_out, total_rows = _pack_param_slab(params)
    d_out_p = _round_up(d_out, SUBLANE)
    assert max_tile_rows % SUBLANE == 0

    @jax.jit
    def forward(x):
        n = x.shape[0]
        assert x.shape[1] == d_in
        xf = x.astype(jnp.float32)

        # ---- input batch stats (tiny XLA reduce; unbiased std like torch.std).
        #      Note: n == 1 yields NaN, same as the PyTorch reference.
        mu = jnp.mean(xf, axis=0)
        var = jnp.sum((xf - mu) ** 2, axis=0) / (n - 1)
        inv = 1.0 / (jnp.sqrt(var) + 1e-4)
        stats = jnp.zeros((d_in_p, 2), jnp.float32)
        stats = stats.at[:d_in, 0].set(inv)
        stats = stats.at[:d_in, 1].set(mu * inv)

        # ---- batch tiling (streaming grid; params + stats stay resident).
        tm = min(max_tile_rows, _round_up(n, SUBLANE))
        n_pad = _round_up(n, tm)
        x_p = jnp.pad(xf, ((0, n_pad - n), (0, d_in_p - d_in)))

        kernel = functools.partial(
            _gaussian_mlp_kernel, offs=offs, d_in_p=d_in_p, d_out_p=d_out_p,
            tanh_dtype=hidden_tanh_dtype)

        cost = pl.CostEstimate(
            flops=2 * n_pad * (d_in_p * LANE + 2 * LANE * LANE),
            transcendentals=2 * LANE * n_pad,
            bytes_accessed=4 * (n_pad * d_in_p + total_rows * LANE
                                + d_in_p * 2 + n_pad * d_out_p),
        )

        out_p = pl.pallas_call(
            kernel,
            out_shape=jax.ShapeDtypeStruct((n_pad, d_out_p), jnp.float32),
            grid=(n_pad // tm,),
            in_specs=[
                pl.BlockSpec((d_in_p, 2), lambda i: (0, 0)),          # stats (resident)
                pl.BlockSpec((tm, d_in_p), lambda i: (i, 0)),         # x tile
                pl.BlockSpec((total_rows, LANE), lambda i: (0, 0)),   # param slab (resident)
            ],
            out_specs=pl.BlockSpec((tm, d_out_p), lambda i: (i, 0)),
            compiler_params=pltpu.CompilerParams(
                dimension_semantics=("parallel",),       # megacore split on v7x
                vmem_limit_bytes=32 * 1024 * 1024,       # fits v5e/v6e/v7x alike
            ),
            cost_estimate=cost,
        )(stats, x_p, slab)

        out = out_p[:n, :d_out]

        # ---- output batch normalization: trivial XLA epilogue over (n, d_out).
        omu = jnp.mean(out, axis=0)
        ovar = jnp.sum((out - omu) ** 2, axis=0) / (n - 1)
        out = (out - omu) / (jnp.sqrt(ovar) + 1e-4)

        # TODO(synk): torch `.double()` -> float64; the cast below silently stays
        # float32 unless jax_enable_x64 is set (TPU-native f64 is emulated & slow).
        return out.astype(jnp.float64)

    return forward


# ----------------------------------------------------------------------------
# Deterministic parameter init (mimics torch.nn.Linear default uniform init)
# ----------------------------------------------------------------------------
def init_params(key, input_dim, hidden_size, output_dim):
    dims = [input_dim, *hidden_size, output_dim]
    params = []
    for i in range(len(dims) - 1):
        fan_in, fan_out = dims[i], dims[i + 1]
        key, kw, kb = jax.random.split(key, 3)
        bound = 1.0 / (fan_in ** 0.5)
        w = jax.random.uniform(kw, (fan_in, fan_out), jnp.float32, -bound, bound)
        b = jax.random.uniform(kb, (1, fan_out), jnp.float32, -bound, bound)
        params.extend([w, b])
    return tuple(params)


if __name__ == "__main__":
    INPUT_DIM = 16
    OUTPUT_DIM = 4
    HIDDEN = (32, 32)
    BATCH = 8

    key = jax.random.PRNGKey(0)
    key, kx = jax.random.split(key)
    x = jax.random.normal(kx, (BATCH, INPUT_DIM), dtype=jnp.float32)

    params = init_params(key, INPUT_DIM, HIDDEN, OUTPUT_DIM)

    forward = make_gaussian_mlp_forward(params)   # slab packed once here
    mean = forward(x)
    jax.block_until_ready(mean)
    assert mean.shape == (BATCH, OUTPUT_DIM)

    # Second call reuses the packed slab + compiled executable (no per-call repack).
    mean2 = forward(x)
    jax.block_until_ready(mean2)

    print("KERNEL_OK")
</pallas_src>

<mosaic_0001>
module attributes {stable_mosaic.version = 11 : i64} {
  func.func @_gaussian_mlp_kernel(%arg0: i32, %arg1: memref<16x2xf32, #tpu.memory_space<vmem>>, %arg2: memref<8x16xf32, #tpu.memory_space<vmem>>, %arg3: memref<296x128xf32, #tpu.memory_space<vmem>>, %arg4: memref<8x8xf32, #tpu.memory_space<vmem>>) attributes {dimension_semantics = [#tpu.dimension_semantics<parallel>], iteration_bounds = array<i64: 1>, scalar_prefetch = 0 : i64, scratch_operands = 0 : i64, tpu.core_type = #tpu.core_type<tc>, window_params = [{pipeline_mode = #tpu.pipeline_mode<synchronous>, transform_indices = @transform_0, window_bounds = array<i64: 16, 2>}, {transform_indices = @transform_1, window_bounds = array<i64: 8, 16>}, {pipeline_mode = #tpu.pipeline_mode<synchronous>, transform_indices = @transform_2, window_bounds = array<i64: 296, 128>}, {transform_indices = @transform_3, window_bounds = array<i64: 8, 8>}]} {
    %c0 = arith.constant 0 : index
    %c0_0 = arith.constant 0 : index
    %0 = vector.load %arg3[%c0, %c0_0] : memref<296x128xf32, #tpu.memory_space<vmem>>, vector<16x128xf32>
    %c16 = arith.constant 16 : index
    %c0_1 = arith.constant 0 : index
    %1 = vector.load %arg3[%c16, %c0_1] : memref<296x128xf32, #tpu.memory_space<vmem>>, vector<1x128xf32>
    %c24 = arith.constant 24 : index
    %c0_2 = arith.constant 0 : index
    %2 = vector.load %arg3[%c24, %c0_2] : memref<296x128xf32, #tpu.memory_space<vmem>>, vector<128x128xf32>
    %c152 = arith.constant 152 : index
    %c0_3 = arith.constant 0 : index
    %3 = vector.load %arg3[%c152, %c0_3] : memref<296x128xf32, #tpu.memory_space<vmem>>, vector<1x128xf32>
    %c160 = arith.constant 160 : index
    %c0_4 = arith.constant 0 : index
    %4 = vector.load %arg3[%c160, %c0_4] : memref<296x128xf32, #tpu.memory_space<vmem>>, vector<128x128xf32>
    %c288 = arith.constant 288 : index
    %c0_5 = arith.constant 0 : index
    %5 = vector.load %arg3[%c288, %c0_5] : memref<296x128xf32, #tpu.memory_space<vmem>>, vector<1x128xf32>
    %c0_6 = arith.constant 0 : index
    %c0_7 = arith.constant 0 : index
    %6 = vector.load %arg1[%c0_6, %c0_7] : memref<16x2xf32, #tpu.memory_space<vmem>>, vector<16x2xf32>
    %7 = vector.extract_strided_slice %6 {offsets = [0, 0], sizes = [16, 1], strides = [1, 1]} : vector<16x2xf32> to vector<16x1xf32>
    %8 = vector.extract_strided_slice %6 {offsets = [0, 1], sizes = [16, 1], strides = [1, 1]} : vector<16x2xf32> to vector<16x1xf32>
    %9 = vector.broadcast %7 : vector<16x1xf32> to vector<16x128xf32>
    %10 = arith.mulf %0, %9 : vector<16x128xf32>
    %11 = vector.broadcast %8 : vector<16x1xf32> to vector<16x128xf32>
    %12 = arith.mulf %0, %11 : vector<16x128xf32>
    %cst = arith.constant dense<0.000000e+00> : vector<128xf32>
    %13 = vector.multi_reduction <add>, %12, %cst [0] : vector<16x128xf32> to vector<128xf32>
    %14 = vector.shape_cast %13 : vector<128xf32> to vector<1x128xf32>
    %15 = arith.subf %1, %14 : vector<1x128xf32>
    %c0_8 = arith.constant 0 : index
    %c0_9 = arith.constant 0 : index
    %16 = vector.load %arg2[%c0_8, %c0_9] : memref<8x16xf32, #tpu.memory_space<vmem>>, vector<8x16xf32>
    %cst_10 = arith.constant dense<0.000000e+00> : vector<8x128xf32>
    %17 = tpu.matmul %16, %10, %cst_10 {dimension_numbers = #tpu.dot_dimension_numbers<[1], [0], [0], [1], [0, 0, 1, 1], [], []>} : vector<8x16xf32>, vector<16x128xf32>, vector<8x128xf32> -> vector<8x128xf32>
    %18 = vector.broadcast %15 : vector<1x128xf32> to vector<8x128xf32>
    %19 = arith.addf %17, %18 : vector<8x128xf32>
    %20 = arith.truncf %19 : vector<8x128xf32> to vector<8x128xbf16>
    %21 = math.tanh %20 : vector<8x128xbf16>
    %22 = arith.extf %21 : vector<8x128xbf16> to vector<8x128xf32>
    %cst_11 = arith.constant dense<0.000000e+00> : vector<8x128xf32>
    %23 = tpu.matmul %22, %2, %cst_11 {dimension_numbers = #tpu.dot_dimension_numbers<[1], [0], [0], [1], [0, 0, 1, 1], [], []>} : vector<8x128xf32>, vector<128x128xf32>, vector<8x128xf32> -> vector<8x128xf32>
    %24 = vector.broadcast %3 : vector<1x128xf32> to vector<8x128xf32>
    %25 = arith.addf %23, %24 : vector<8x128xf32>
    %26 = arith.truncf %25 : vector<8x128xf32> to vector<8x128xbf16>
    %27 = math.tanh %26 : vector<8x128xbf16>
    %28 = arith.extf %27 : vector<8x128xbf16> to vector<8x128xf32>
    %cst_12 = arith.constant dense<0.000000e+00> : vector<8x128xf32>
    %29 = tpu.matmul %28, %4, %cst_12 {dimension_numbers = #tpu.dot_dimension_numbers<[1], [0], [0], [1], [0, 0, 1, 1], [], []>} : vector<8x128xf32>, vector<128x128xf32>, vector<8x128xf32> -> vector<8x128xf32>
    %30 = vector.broadcast %5 : vector<1x128xf32> to vector<8x128xf32>
    %31 = arith.addf %29, %30 : vector<8x128xf32>
    %32 = vector.extract_strided_slice %31 {offsets = [0, 0], sizes = [8, 8], strides = [1, 1]} : vector<8x128xf32> to vector<8x8xf32>
    %c0_13 = arith.constant 0 : index
    %c0_14 = arith.constant 0 : index
    %33 = vector.load %arg4[%c0_13, %c0_14] : memref<8x8xf32, #tpu.memory_space<vmem>>, vector<8x8xf32>
    tpu.vector_store %arg4[%c0_13, %c0_14], %32 {strides = array<i32>} : memref<8x8xf32, #tpu.memory_space<vmem>>, vector<8x8xf32>,
    return
  }
  func.func @transform_0(%arg0: i32) -> (i32, i32) {
    %c0_i32 = arith.constant 0 : i32
    %c0_i32_0 = arith.constant 0 : i32
    %c0_i32_1 = arith.constant 0 : i32
    return %c0_i32, %c0_i32_0 : i32, i32
  }
  func.func @transform_1(%arg0: i32) -> (i32, i32) {
    %c0_i32 = arith.constant 0 : i32
    %c0_i32_0 = arith.constant 0 : i32
    return %arg0, %c0_i32 : i32, i32
  }
  func.func @transform_2(%arg0: i32) -> (i32, i32) {
    %c0_i32 = arith.constant 0 : i32
    %c0_i32_0 = arith.constant 0 : i32
    %c0_i32_1 = arith.constant 0 : i32
    return %c0_i32, %c0_i32_0 : i32, i32
  }
  func.func @transform_3(%arg0: i32) -> (i32, i32) {
    %c0_i32 = arith.constant 0 : i32
    %c0_i32_0 = arith.constant 0 : i32
    return %arg0, %c0_i32 : i32, i32
  }
}

</mosaic_0001>

<llo_original>
// kernel: forward.1
$region0: #{forward.1}
  #allocation0 [shape = 'u32[]', space=smem, size = 0x4, offset = 0x4, fixed_abs, tag = 'smem constant byte address 0x4 - core index']
  #allocation1 [shape = 'u32[72,128]{1,0:T(1,128)}', space=vmem, size = 0x9000, scoped, tag = 'internal scratch']
  %s0 = inlined_call_operand.vmem [shape: f32[16,2], index: 0, kind: input, shape index: {}]
  %s1 = inlined_call_operand.vmem [shape: f32[8,16], index: 1, kind: input, shape index: {}]
  %s2 = inlined_call_operand.hbm [shape: f32[296,128], index: 2, kind: input, shape index: {}]
  %s3 = inlined_call_operand.vmem [shape: f32[8,8], index: 3, kind: output, shape index: {}]
  %s4 = sld [smem:[#allocation0]]
  $region26: #{forward.1} parent=0
    _
  %s6 = ssub.s32 1, %s4
  %s7 = scalar_select 0, %s6, %s4
  $region1: #{forward.1} parent=0
    #allocation2 [shape = 'u8[151552]{0}', space=vmem, size = 0x25000, scoped, tag = 'input window, operand 2, single buffered']
    #allocation3 [shape = 's32[1]{0}', space=sflag, size = 0x4, scoped, tag = 'scoped memory for forward.1']
    %8 = vsyncpa [#allocation3], 0
    // Predicated region
    $region2: #{forward.1} parent=1 // pred_check
      _
    $region3: #{forward.1} parent=1 // pred_check_branch
      %10 = sbr.rel (0) target = $region5
    $region4: #{forward.1} parent=1 // pred_region
      _
    $region5: #{forward.1} parent=1 // pred_fallthru
      _
    // Predicated region
    $region6: #{forward.1} parent=1 // pred_check
      _
    $region7: #{forward.1} parent=1 // pred_check_branch
      %12 = sbr.rel (0) target = $region9
    $region8: #{forward.1} parent=1 // pred_region
      _
    $region9: #{forward.1} parent=1 // pred_fallthru
      _
    // Predicated region
    $region10: #{forward.1} parent=1 // pred_check
      _
    $region11: #{forward.1} parent=1 // pred_check_branch
      %14 = sbr.rel (0) target = $region13
    $region12: #{forward.1} parent=1 // pred_region
      %16 = vsyncadd [#allocation3], 0
      %s17 = sshll.u32 %s2, 4
      %s18 = int_to_ptr.hbm [resolvable:$true] %s17
      %s19 = sshll.u32 [#allocation2], 4
      %s20 = int_to_ptr.vmem [resolvable:$true] %s19
      %25 = dma.hbm_to_vmem [thread:$0]  %s18, 4736, %s20, [#allocation3], 128, 128, 8
    $region13: #{forward.1} parent=1 // pred_fallthru
      _
    // Predicated region
    $region14: #{forward.1} parent=1 // pred_check
      _
    $region15: #{forward.1} parent=1 // pred_check_branch
      %27 = sbr.rel (0) target = $region17
    $region16: #{forward.1} parent=1 // pred_region
      %29 = dma.done [#allocation3], 4736
    $region17: #{forward.1} parent=1 // pred_fallthru
      _
    %v30 = vld [vmem:[#allocation2] sm:$0xff]
    %v31 = vld [vmem:[#allocation2 + $0x8] sm:$0xff]
    %v32 = vld [vmem:[#allocation2 + $0x10] sm:$0x1]
    %v33 = vld [vmem:[#allocation2 + $0x18] sm:$0xff]
    %v34 = vld [vmem:[#allocation2 + $0x20] sm:$0xff]
    %v35 = vld [vmem:[#allocation2 + $0x28] sm:$0xff]
    %v36 = vld [vmem:[#allocation2 + $0x30] sm:$0xff]
    %v37 = vld [vmem:[#allocation2 + $0x38] sm:$0xff]
    %v38 = vld [vmem:[#allocation2 + $0x40] sm:$0xff]
    %v39 = vld [vmem:[#allocation2 + $0x48] sm:$0xff]
    %v40 = vld [vmem:[#allocation2 + $0x50] sm:$0xff]
    %v41 = vld [vmem:[#allocation2 + $0x58] sm:$0xff]
    %v42 = vld [vmem:[#allocation2 + $0x60] sm:$0xff]
    %v43 = vld [vmem:[#allocation2 + $0x68] sm:$0xff]
    %v44 = vld [vmem:[#allocation2 + $0x70] sm:$0xff]
    %v45 = vld [vmem:[#allocation2 + $0x78] sm:$0xff]
    %v46 = vld [vmem:[#allocation2 + $0x80] sm:$0xff]
    %v47 = vld [vmem:[#allocation2 + $0x88] sm:$0xff]
    %v48 = vld [vmem:[#allocation2 + $0x90] sm:$0xff]
    %v49 = vld [vmem:[#allocation2 + $0x98] sm:$0x1]
    %v50 = vld [vmem:[#allocation2 + $0xa0] sm:$0xff]
    %v51 = vld [vmem:[#allocation2 + $0xa8] sm:$0xff]
    %v52 = vld [vmem:[#allocation2 + $0xb0] sm:$0xff]
    %v53 = vld [vmem:[#allocation2 + $0xb8] sm:$0xff]
    %v54 = vld [vmem:[#allocation2 + $0xc0] sm:$0xff]
    %v55 = vld [vmem:[#allocation2 + $0xc8] sm:$0xff]
    %v56 = vld [vmem:[#allocation2 + $0xd0] sm:$0xff]
    %v57 = vld [vmem:[#allocation2 + $0xd8] sm:$0xff]
    %v58 = vld [vmem:[#allocation2 + $0xe0] sm:$0xff]
    %v59 = vld [vmem:[#allocation2 + $0xe8] sm:$0xff]
    %v60 = vld [vmem:[#allocation2 + $0xf0] sm:$0xff]
    %v61 = vld [vmem:[#allocation2 + $0xf8] sm:$0xff]
    %v62 = vld [vmem:[#allocation2 + $0x100] sm:$0xff]
    %v63 = vld [vmem:[#allocation2 + $0x108] sm:$0xff]
    %v64 = vld [vmem:[#allocation2 + $0x110] sm:$0xff]
    %v65 = vld [vmem:[#allocation2 + $0x118] sm:$0xff]
    %v66 = vld [vmem:[#allocation2 + $0x120] sm:$0x1]
    %v67 = vld [vmem:[%s0] sm:$0xff]
    %v68 = vld [vmem:[%s0 + $0x8] sm:$0xff]
    %70 = vset.pattern.permute.xlu0 0
    %71 = vperm.xlu0 %70, %v67
    %v72 = vpop.permute.xlu0 %71
    %75 = vset.pattern.permute.xlu0 0
    %76 = vperm.xlu0 %75, %v68
    %v77 = vpop.permute.xlu0 %76
    %v79 = vmul.f32 %v30, %v72
    %v80 = vmul.f32 %v31, %v77
    %81 = vset.pattern.permute.xlu0 1
    %82 = vperm.xlu0 %81, %v67
    %v83 = vpop.permute.xlu0 %82
    %85 = vset.pattern.permute.xlu0 1
    %86 = vperm.xlu0 %85, %v68
    %v87 = vpop.permute.xlu0 %86
    %v89 = vmul.f32 %v30, %v83
    %v90 = vmul.f32 %v31, %v87
    %v91 = vadd.f32 %v89, %v90
    %v92 = vrot.slane %v91, 4
    %v93 = vadd.f32 %v91, %v92
    %v94 = vrot.slane %v93, 2
    %v95 = vadd.f32 %v93, %v94
    %v96 = vrot.slane %v95, 1
    %v97 = vadd.f32 %v95, %v96
    %v98 = vsub.f32 %v32, %v97
    %v99 = vld [vmem:[%s1] sm:$0xff]
    %v100 = vperm.slane %v98, 0
    %vm101 = vcmask 130048
    %v103 = vsel %vm101, %v99, 0
    %105 = vmatpush.msra.mxu0 0.0
    %106 = vmatpush.msra.mxu0 0.0
    %107 = vmatpush.msra.mxu0 0.0
    %108 = vmatpush.msra.mxu0 0.0
    %109 = vmatpush.msra.mxu0 0.0
    %110 = vmatpush.msra.mxu0 0.0
    %111 = vmatpush.msra.mxu0 0.0
    %112 = vmatpush.msra.mxu0 0.0
    %113 = vmatpush.msra.mxu0 0.0
    %114 = vmatpush.msra.mxu0 0.0
    %115 = vmatpush.msra.mxu0 0.0
    %116 = vmatpush.msra.mxu0 0.0
    %117 = vmatpush.msra.mxu0 0.0
    %118 = vmatpush.msra.mxu0 0.0
    %119 = vmatpush.msra.mxu0 %v80
    %120 = vmatpush.msra.mxu0 %v79
    %121 = vmatmul.f32.gmra.mxu0 %v103
    %v122 = vpop.f32.mrf.mxu0
    %v123 = vadd.f32 %v100, %v122
    %124 = vdwg.mxu0
    %v125 = vpack.c.bf16 %v123, %v123
    %v126 = vunpack.c.l.bf16 %v125
    %v127 = vtanh.pop %v126
    %v128 = vpack.c.bf16 %v127, %v127
    %v129 = vunpack.c.l.bf16 %v128
    %v130 = vperm.slane %v49, 0
    %131 = vmatpush.msra.mxu0 %v48
    %132 = vmatpush.msra.mxu0 %v47
    %133 = vmatpush.msra.mxu0 %v46
    %134 = vmatpush.msra.mxu0 %v45
    %135 = vmatpush.msra.mxu0 %v44
    %136 = vmatpush.msra.mxu0 %v43
    %137 = vmatpush.msra.mxu0 %v42
    %138 = vmatpush.msra.mxu0 %v41
    %139 = vmatpush.msra.mxu0 %v40
    %140 = vmatpush.msra.mxu0 %v39
    %141 = vmatpush.msra.mxu0 %v38
    %142 = vmatpush.msra.mxu0 %v37
    %143 = vmatpush.msra.mxu0 %v36
    %144 = vmatpush.msra.mxu0 %v35
    %145 = vmatpush.msra.mxu0 %v34
    %146 = vmatpush.msra.mxu0 %v33
    %147 = vmatmul.f32.gmra.mxu0 %v129
    %v148 = vpop.f32.mrf.mxu0
    %v149 = vadd.f32 %v130, %v148
    %150 = vdwg.mxu0
    %v151 = vpack.c.bf16 %v149, %v149
    %v152 = vunpack.c.l.bf16 %v151
    %v153 = vtanh.pop %v152
    %v154 = vpack.c.bf16 %v153, %v153
    %v155 = vunpack.c.l.bf16 %v154
    %v156 = vperm.slane %v66, 0
    %157 = vmatpush.msra.mxu0 %v65
    %158 = vmatpush.msra.mxu0 %v64
    %159 = vmatpush.msra.mxu0 %v63
    %160 = vmatpush.msra.mxu0 %v62
    %161 = vmatpush.msra.mxu0 %v61
    %162 = vmatpush.msra.mxu0 %v60
    %163 = vmatpush.msra.mxu0 %v59
    %164 = vmatpush.msra.mxu0 %v58
    %165 = vmatpush.msra.mxu0 %v57
    %166 = vmatpush.msra.mxu0 %v56
    %167 = vmatpush.msra.mxu0 %v55
    %168 = vmatpush.msra.mxu0 %v54
    %169 = vmatpush.msra.mxu0 %v53
    %170 = vmatpush.msra.mxu0 %v52
    %171 = vmatpush.msra.mxu0 %v51
    %172 = vmatpush.msra.mxu0 %v50
    %173 = vmatmul.f32.gmra.mxu0 %v155
    %v174 = vpop.f32.mrf.mxu0
    %v175 = vadd.f32 %v156, %v174
    %176 = vdwg.mxu0
    %vm177 = vcmask 64512
    %178 = vst.msk [vmem:[%s3] sm:$0xff] %vm177, %v175
    // Predicated region
    $region18: #{forward.1} parent=1 // pred_check
      _
    $region19: #{forward.1} parent=1 // pred_check_branch
      %180 = sbr.rel (0) target = $region21
    $region20: #{forward.1} parent=1 // pred_region
      _
    $region21: #{forward.1} parent=1 // pred_fallthru
      _
    // Predicated region
    $region22: #{forward.1} parent=1 // pred_check
      _
    $region23: #{forward.1} parent=1 // pred_check_branch
      %182 = sbr.rel (0) target = $region25
    $region24: #{forward.1} parent=1 // pred_region
      _
    $region25: #{forward.1} parent=1 // pred_fallthru
      _
    %183 = vsyncpa [#allocation3], 1

</llo_original>
